<compile_context>
chip_gen: v7x
topology: tpu7x:2x2x1
jax: 0.10.0
libtpu: 0.0.40
codegen_flags: <defaults>
</compile_context>

<pallas_src>
import jax
import jax.numpy as jnp
from jax import lax
from jax.experimental import pallas as pl
from jax.experimental.pallas import tpu as pltpu


def _self_attn_kernel(x_ref, wqkv_ref, o_ref):
    # x_ref:    (BB, S, D)  batch block of inputs
    # wqkv_ref: (D, 3D)     fused [ (Wq/D)^T | Wk^T | Wv^T ], resident across grid
    # o_ref:    (BB, S, D)  output block (natural layout, one contiguous store)
    BB, S, D = x_ref.shape

    x = x_ref[...]                                           # (BB, S, D)
    wqkv = wqkv_ref[...]                                     # (D, 3D)

    # One fused QKV projection on the MXU with M = BB*S rows
    # (1/input_size already folded into the Wq columns).
    qkv = jnp.dot(x.reshape(BB * S, D), wqkv,
                  preferred_element_type=jnp.float32)        # (BB*S, 3D)
    qkv = qkv.reshape(BB, S, 3 * D)
    q = qkv[:, :, 0:D]                                       # (BB, S, D)
    k = qkv[:, :, D:2 * D]                                   # (BB, S, D)
    v = qkv[:, :, 2 * D:3 * D]                               # (BB, S, D)

    # Batched NT contraction over the D axes (no explicit k transpose).
    scores = jnp.einsum('bqd,bkd->bqk', q, k,
                        preferred_element_type=jnp.float32)  # (BB, S, S)

    # Numerically-stable softmax over the last axis (dim=2 of (B, S, S)).
    m = jnp.max(scores, axis=-1, keepdims=True)
    e = jnp.exp(scores - m)
    denom = jnp.sum(e, axis=-1, keepdims=True)               # (BB, S, 1)

    # Normalize the small (BB, S, D) result instead of the (BB, S, S) matrix;
    # approx reciprocal goes to the (otherwise idle) EUP slot.
    out = jnp.einsum('bqk,bkd->bqd', e, v,
                     preferred_element_type=jnp.float32)     # (BB, S, D)
    out = out * pl.reciprocal(denom, approx=True)

    o_ref[...] = out.astype(o_ref.dtype)


def _largest_divisor_leq(n, target):
    target = max(1, min(n, target))
    best = 1
    for d in range(1, target + 1):
        if n % d == 0:
            best = d
    return best


def _pick_batch_block(B, S, D):
    """Batch-block (BB) selection per TPU generation.

    v7x (2 TCs): grid=(2,) with BB=B//2 so each TensorCore runs one grid step.
    v5e/v6e (1 TC): collapse to a single invocation for small B; for large B cap
    the block at ~2 MiB of x so BlockSpec double-buffering overlaps DMA with
    compute (also keeps VMEM use far below the scoped limit on every chip).
    """
    try:
        kind = jax.devices()[0].device_kind.lower()
    except Exception:
        kind = ""
    two_tc = "v7" in kind            # v7x: 2 TensorCores per chip

    # Cap so each x block stays <= ~2 MiB (f32); generous at small shapes.
    max_bb = max(1, (2 << 20) // (S * D * 4))

    if two_tc and B >= 2:
        target = max(1, B // 2)      # one grid step per TensorCore
    else:
        target = B                   # 1-TC chips: no per-step grid overhead
    target = min(target, max_bb)
    return _largest_divisor_leq(B, target)


def prepare_qkv_weights(wq, wk, wv):
    """One-time weight prep (hoist out of the per-call path): fold the
    1/input_size scale into Wq, transpose nn.Linear (out,in) -> (in,out), and
    fuse Q/K/V into a single (D, 3D) MXU operand."""
    D = wq.shape[0]
    return jnp.concatenate([(wq / D).T, wk.T, wv.T], axis=1)  # (D, 3D)


def self_attn_mini_prepared(x, w_qkv, *, batch_block=None):
    """x: (B, S, D) float32; w_qkv: (D, 3D) prepared by prepare_qkv_weights."""
    B, S, D = x.shape
    BB = _pick_batch_block(B, S, D) if batch_block is None else \
        _largest_divisor_leq(B, batch_block)

    # NOTE(perf, v7x): if profiling shows only one TensorCore active with
    # dimension_semantics=("parallel",), switch to (pltpu.CORE_PARALLEL,).
    # VMEM is a non-issue at these shapes; if B/S/D scale up, re-derive BB per
    # generation (v7x has 64 MiB physical / 32 MiB scoped) and, if needed, raise
    # vmem_limit_bytes in CompilerParams.
    out = pl.pallas_call(
        _self_attn_kernel,
        out_shape=jax.ShapeDtypeStruct((B, S, D), x.dtype),
        grid_spec=pltpu.PrefetchScalarGridSpec(
            num_scalar_prefetch=0,
            grid=(B // BB,),
            in_specs=[
                pl.BlockSpec((BB, S, D), lambda i: (i, 0, 0)),   # x batch block
                pl.BlockSpec((D, 3 * D), lambda i: (0, 0)),      # resident weights
            ],
            out_specs=pl.BlockSpec((BB, S, D), lambda i: (i, 0, 0)),
        ),
        compiler_params=pltpu.CompilerParams(
            dimension_semantics=("parallel",),
        ),
    )(x, w_qkv)
    return out


def self_attn_mini(x, wq, wk, wv, *, batch_block=None):
    """Convenience wrapper taking raw nn.Linear ((out, in)) weights."""
    return self_attn_mini_prepared(x, prepare_qkv_weights(wq, wk, wv),
                                   batch_block=batch_block)


def self_attn_mini_ref(x, wq, wk, wv):
    """Pure-JAX reference mirroring the PyTorch forward."""
    D = x.shape[-1]
    q = x @ wq.T
    k = x @ wk.T
    v = x @ wv.T
    wt = jnp.einsum("bsd,btd->bst", q, k) / D
    attn = jax.nn.softmax(wt, axis=2)
    return jnp.einsum("bst,btd->bsd", attn, v)


if __name__ == "__main__":
    B, S, D = 2, 8, 32   # batch, seq, input_size

    key = jax.random.PRNGKey(0)
    kx, kq, kk, kv = jax.random.split(key, 4)

    x = jax.random.normal(kx, (B, S, D), dtype=jnp.float32)
    # Deterministic nn.Linear-style init (uniform in [-1/sqrt(D), 1/sqrt(D)])
    bound = 1.0 / (D ** 0.5)
    wq = jax.random.uniform(kq, (D, D), jnp.float32, -bound, bound)
    wk = jax.random.uniform(kk, (D, D), jnp.float32, -bound, bound)
    wv = jax.random.uniform(kv, (D, D), jnp.float32, -bound, bound)

    # Hoisted one-time weight prep; the per-call path is just the pallas_call.
    w_qkv = prepare_qkv_weights(wq, wk, wv)
    attn_fn = jax.jit(self_attn_mini_prepared)

    out = jax.block_until_ready(attn_fn(x, w_qkv))

    ref = self_attn_mini_ref(x, wq, wk, wv)
    assert out.shape == (B, S, D)
    # Tolerance loosened from 1e-5 because the softmax denominator uses the
    # EUP approximate reciprocal (rel. err ~1e-4).
    assert jnp.allclose(out, ref, atol=2e-3, rtol=2e-3), "mismatch vs reference"

    print("KERNEL_OK")
</pallas_src>

<mosaic_0001>
module attributes {stable_mosaic.version = 11 : i64} {
  func.func @_self_attn_kernel(%arg0: i32, %arg1: memref<2x8x32xf32, #tpu.memory_space<vmem>>, %arg2: memref<32x96xf32, #tpu.memory_space<vmem>>, %arg3: memref<2x8x32xf32, #tpu.memory_space<vmem>>) attributes {dimension_semantics = [#tpu.dimension_semantics<parallel>], iteration_bounds = array<i64: 1>, scalar_prefetch = 0 : i64, scratch_operands = 0 : i64, tpu.core_type = #tpu.core_type<tc>, window_params = [{transform_indices = @transform_0, window_bounds = array<i64: 2, 8, 32>}, {pipeline_mode = #tpu.pipeline_mode<synchronous>, transform_indices = @transform_1, window_bounds = array<i64: 32, 96>}, {transform_indices = @transform_2, window_bounds = array<i64: 2, 8, 32>}]} {
    %c0 = arith.constant 0 : index
    %c0_0 = arith.constant 0 : index
    %c0_1 = arith.constant 0 : index
    %0 = vector.load %arg1[%c0, %c0_0, %c0_1] : memref<2x8x32xf32, #tpu.memory_space<vmem>>, vector<2x8x32xf32>
    %c0_2 = arith.constant 0 : index
    %c0_3 = arith.constant 0 : index
    %1 = vector.load %arg2[%c0_2, %c0_3] : memref<32x96xf32, #tpu.memory_space<vmem>>, vector<32x96xf32>
    %2 = vector.shape_cast %0 : vector<2x8x32xf32> to vector<16x32xf32>
    %cst = arith.constant dense<0.000000e+00> : vector<16x96xf32>
    %3 = tpu.matmul %2, %1, %cst {dimension_numbers = #tpu.dot_dimension_numbers<[1], [0], [0], [1], [0, 0, 1, 1], [], []>} : vector<16x32xf32>, vector<32x96xf32>, vector<16x96xf32> -> vector<16x96xf32>
    %4 = vector.shape_cast %3 : vector<16x96xf32> to vector<2x8x96xf32>
    %5 = vector.extract_strided_slice %4 {offsets = [0, 0, 0], sizes = [2, 8, 32], strides = [1, 1, 1]} : vector<2x8x96xf32> to vector<2x8x32xf32>
    %6 = vector.extract_strided_slice %4 {offsets = [0, 0, 32], sizes = [2, 8, 32], strides = [1, 1, 1]} : vector<2x8x96xf32> to vector<2x8x32xf32>
    %7 = vector.extract_strided_slice %4 {offsets = [0, 0, 64], sizes = [2, 8, 32], strides = [1, 1, 1]} : vector<2x8x96xf32> to vector<2x8x32xf32>
    "tpu.trace_start"() <{level = 10 : i32, message = "bqd,bkd->bqk"}> : () -> ()
    %cst_4 = arith.constant dense<0.000000e+00> : vector<2x8x8xf32>
    %8 = tpu.matmul %5, %6, %cst_4 {dimension_numbers = #tpu.dot_dimension_numbers<[2], [2], [1], [1], [0, 0, 0, 1, 1, 1], [0], [0]>} : vector<2x8x32xf32>, vector<2x8x32xf32>, vector<2x8x8xf32> -> vector<2x8x8xf32>
    "tpu.trace_stop"() : () -> ()
    %cst_5 = arith.constant dense<0xFF800000> : vector<2x8xf32>
    %9 = vector.multi_reduction <maximumf>, %8, %cst_5 [2] : vector<2x8x8xf32> to vector<2x8xf32>
    %10 = vector.shape_cast %9 : vector<2x8xf32> to vector<2x8x1xf32>
    %11 = vector.broadcast %10 : vector<2x8x1xf32> to vector<2x8x8xf32>
    %12 = arith.subf %8, %11 : vector<2x8x8xf32>
    %13 = math.exp %12 : vector<2x8x8xf32>
    %cst_6 = arith.constant dense<0.000000e+00> : vector<2x8xf32>
    %14 = vector.multi_reduction <add>, %13, %cst_6 [2] : vector<2x8x8xf32> to vector<2x8xf32>
    %15 = vector.shape_cast %14 : vector<2x8xf32> to vector<2x8x1xf32>
    "tpu.trace_start"() <{level = 10 : i32, message = "bqk,bkd->bqd"}> : () -> ()
    %cst_7 = arith.constant dense<0.000000e+00> : vector<2x8x32xf32>
    %16 = tpu.matmul %13, %7, %cst_7 {dimension_numbers = #tpu.dot_dimension_numbers<[2], [1], [1], [2], [0, 0, 0, 1, 1, 2], [0], [0]>} : vector<2x8x8xf32>, vector<2x8x32xf32>, vector<2x8x32xf32> -> vector<2x8x32xf32>
    "tpu.trace_stop"() : () -> ()
    %17 = tpu.reciprocal %15 {approx = true} : vector<2x8x1xf32> -> vector<2x8x1xf32>
    %18 = vector.broadcast %17 : vector<2x8x1xf32> to vector<2x8x32xf32>
    %19 = arith.mulf %16, %18 : vector<2x8x32xf32>
    %c0_8 = arith.constant 0 : index
    %c0_9 = arith.constant 0 : index
    %c0_10 = arith.constant 0 : index
    %20 = vector.load %arg3[%c0_8, %c0_9, %c0_10] : memref<2x8x32xf32, #tpu.memory_space<vmem>>, vector<2x8x32xf32>
    tpu.vector_store %arg3[%c0_8, %c0_9, %c0_10], %19 {strides = array<i32>} : memref<2x8x32xf32, #tpu.memory_space<vmem>>, vector<2x8x32xf32>,
    return
  }
  func.func @transform_0(%arg0: i32) -> (i32, i32, i32) {
    %c0_i32 = arith.constant 0 : i32
    %c0_i32_0 = arith.constant 0 : i32
    %c0_i32_1 = arith.constant 0 : i32
    return %arg0, %c0_i32, %c0_i32_0 : i32, i32, i32
  }
  func.func @transform_1(%arg0: i32) -> (i32, i32) {
    %c0_i32 = arith.constant 0 : i32
    %c0_i32_0 = arith.constant 0 : i32
    %c0_i32_1 = arith.constant 0 : i32
    return %c0_i32, %c0_i32_0 : i32, i32
  }
  func.func @transform_2(%arg0: i32) -> (i32, i32, i32) {
    %c0_i32 = arith.constant 0 : i32
    %c0_i32_0 = arith.constant 0 : i32
    %c0_i32_1 = arith.constant 0 : i32
    return %arg0, %c0_i32, %c0_i32_0 : i32, i32, i32
  }
}

</mosaic_0001>

<llo_original>
// kernel: self_attn_mini_prepared.1
$region0: #{self_attn_mini_prepared.1}
  #allocation0 [shape = 'u32[]', space=smem, size = 0x4, offset = 0x4, fixed_abs, tag = 'smem constant byte address 0x4 - core index']
  #allocation1 [shape = 'u32[144,128]{1,0:T(1,128)}', space=vmem, size = 0x12000, scoped, tag = 'internal scratch']
  %s0 = inlined_call_operand.hbm [shape: f32[2,8,32], index: 0, kind: input, shape index: {}]
  %s1 = inlined_call_operand.hbm [shape: f32[32,96], index: 1, kind: input, shape index: {}]
  %s2 = inlined_call_operand.hbm [shape: f32[2,8,32], index: 2, kind: output, shape index: {}]
  %s3 = sld [smem:[#allocation0]]
  $region26: #{self_attn_mini_prepared.1} parent=0
    _
  %s5 = ssub.s32 1, %s3
  %s6 = scalar_select 0, %s5, %s3
  $region1: #{self_attn_mini_prepared.1} parent=0
    #allocation2 [shape = 'u8[8192]{0}', space=vmem, size = 0x2000, scoped, tag = 'input window, operand 0, single buffered']
    #allocation3 [shape = 's32[1]{0}', space=sflag, size = 0x4, scoped, tag = 'scoped memory for self_attn_mini_prepared.1']
    #allocation4 [shape = 's32[1]{0}', space=sflag, size = 0x4, scoped, tag = 'scoped memory for self_attn_mini_prepared.1']
    #allocation5 [shape = 'u8[16384]{0}', space=vmem, size = 0x4000, scoped, tag = 'input window, operand 1, single buffered']
    #allocation6 [shape = 's32[1]{0}', space=sflag, size = 0x4, scoped, tag = 'scoped memory for self_attn_mini_prepared.1']
    #allocation7 [shape = 'u8[8192]{0}', space=vmem, size = 0x2000, scoped, tag = 'output window, operand 0, single buffered']
    %7 = vsyncpa [#allocation3], 0
    %8 = vsyncpa [#allocation6], 0
    %9 = vsyncpa [#allocation4], 0
    // Predicated region
    $region2: #{self_attn_mini_prepared.1} parent=1 // pred_check
      _
    $region3: #{self_attn_mini_prepared.1} parent=1 // pred_check_branch
      %11 = sbr.rel (0) target = $region5
    $region4: #{self_attn_mini_prepared.1} parent=1 // pred_region
      %s13 = ssub.s32 256, 256
      %14 = vsyncadd [#allocation3], %s13
      %s15 = sshll.u32 [#allocation2], 4
      %s16 = int_to_ptr.vmem [resolvable:$true] %s15
      %21 = dma.hbm_to_vmem [thread:$0]  %s0, 256, %s16, [#allocation3], 128, 128, 8
    $region5: #{self_attn_mini_prepared.1} parent=1 // pred_fallthru
      _
    // Predicated region
    $region6: #{self_attn_mini_prepared.1} parent=1 // pred_check
      _
    $region7: #{self_attn_mini_prepared.1} parent=1 // pred_check_branch
      %23 = sbr.rel (0) target = $region9
    $region8: #{self_attn_mini_prepared.1} parent=1 // pred_region
      %s25 = ssub.s32 512, 512
      %26 = vsyncadd [#allocation6], %s25
      %s27 = sshll.u32 [#allocation5], 4
      %s28 = int_to_ptr.vmem [resolvable:$true] %s27
      %33 = dma.hbm_to_vmem [thread:$0]  %s1, 512, %s28, [#allocation6], 128, 128, 8
    $region9: #{self_attn_mini_prepared.1} parent=1 // pred_fallthru
      _
    // Predicated region
    $region10: #{self_attn_mini_prepared.1} parent=1 // pred_check
      _
    $region11: #{self_attn_mini_prepared.1} parent=1 // pred_check_branch
      %35 = sbr.rel (0) target = $region13
    $region12: #{self_attn_mini_prepared.1} parent=1 // pred_region
      %36 = dma.done [#allocation3], 256
    $region13: #{self_attn_mini_prepared.1} parent=1 // pred_fallthru
      _
    // Predicated region
    $region14: #{self_attn_mini_prepared.1} parent=1 // pred_check
      _
    $region15: #{self_attn_mini_prepared.1} parent=1 // pred_check_branch
      %38 = sbr.rel (0) target = $region17
    $region16: #{self_attn_mini_prepared.1} parent=1 // pred_region
      %39 = dma.done [#allocation6], 512
    $region17: #{self_attn_mini_prepared.1} parent=1 // pred_fallthru
      _
    %v40 = vld [vmem:[#allocation2] sm:$0xff]
    %v41 = vld [vmem:[#allocation2 + $0x8] sm:$0xff]
    %v42 = vld [vmem:[#allocation5] sm:$0xff]
    %v43 = vld [vmem:[#allocation5 + $0x8] sm:$0xff]
    %v44 = vld [vmem:[#allocation5 + $0x10] sm:$0xff]
    %v45 = vld [vmem:[#allocation5 + $0x18] sm:$0xff]
    %vm46 = vcmask 261120
    %v48 = vsel %vm46, %v40, 0
    %v51 = vsel %vm46, %v41, 0
    %53 = vmatprep.subr.mxu0 0.0
    %54 = vmatpush1.msra.mxu0 %v42
    %55 = vmatprep.subr.mxu0 0.0
    %56 = vmatpush1.msra.mxu0 %v43
    %57 = vmatprep.subr.mxu0 0.0
    %58 = vmatpush1.msra.mxu0 %v44
    %59 = vmatprep.subr.mxu0 0.0
    %60 = vmatpush1.msra.mxu0 %v45
    %61 = vmatprep.subr.mxu0 0.0
    %62 = vmatpush1.msra.mxu0 0.0
    %63 = vmatprep.subr.mxu0 0.0
    %64 = vmatpush1.msra.mxu0 0.0
    %65 = vmatprep.subr.mxu0 0.0
    %66 = vmatpush1.msra.mxu0 0.0
    %67 = vmatprep.subr.mxu0 0.0
    %68 = vmatpush1.msra.mxu0 0.0
    %69 = vmatprep.subr.mxu0 0.0
    %70 = vmatpush1.msra.mxu0 0.0
    %71 = vmatprep.subr.mxu0 0.0
    %72 = vmatpush1.msra.mxu0 0.0
    %73 = vmatprep.subr.mxu0 0.0
    %74 = vmatpush1.msra.mxu0 0.0
    %75 = vmatprep.subr.mxu0 0.0
    %76 = vmatpush1.msra.mxu0 0.0
    %77 = vmatprep.subr.mxu0 0.0
    %78 = vmatpush1.msra.mxu0 0.0
    %79 = vmatprep.subr.mxu0 0.0
    %80 = vmatpush1.msra.mxu0 0.0
    %81 = vmatprep.subr.mxu0 0.0
    %82 = vmatpush1.msra.mxu0 0.0
    %83 = vmatprep.subr.mxu0 0.0
    %84 = vmatpush1.msra.mxu0 0.0
    %85 = vmatprep.subr.mxu0 0.0
    %86 = vmatpush1.msra.mxu0 0.0
    %87 = vmatprep.subr.mxu0 0.0
    %88 = vmatpush1.msra.mxu0 0.0
    %89 = vmatprep.subr.mxu0 0.0
    %90 = vmatpush1.msra.mxu0 0.0
    %91 = vmatprep.subr.mxu0 0.0
    %92 = vmatpush1.msra.mxu0 0.0
    %93 = vmatprep.subr.mxu0 0.0
    %94 = vmatpush1.msra.mxu0 0.0
    %95 = vmatprep.subr.mxu0 0.0
    %96 = vmatpush1.msra.mxu0 0.0
    %97 = vmatprep.subr.mxu0 0.0
    %98 = vmatpush1.msra.mxu0 0.0
    %99 = vmatprep.subr.mxu0 0.0
    %100 = vmatpush1.msra.mxu0 0.0
    %101 = vmatprep.subr.mxu0 0.0
    %102 = vmatpush1.msra.mxu0 0.0
    %103 = vmatprep.subr.mxu0 0.0
    %104 = vmatpush1.msra.mxu0 0.0
    %105 = vmatprep.subr.mxu0 0.0
    %106 = vmatpush1.msra.mxu0 0.0
    %107 = vmatprep.subr.mxu0 0.0
    %108 = vmatpush1.msra.mxu0 0.0
    %109 = vmatprep.subr.mxu0 0.0
    %110 = vmatpush1.msra.mxu0 0.0
    %111 = vmatprep.subr.mxu0 0.0
    %112 = vmatpush1.msra.mxu0 0.0
    %113 = vmatprep.subr.mxu0 0.0
    %114 = vmatpush1.msra.mxu0 0.0
    %115 = vmatprep.subr.mxu0 0.0
    %116 = vmatpush1.msra.mxu0 0.0
    %117 = vmatprep.mubr.f32.mxu0 0.0
    %118 = vmatmul.mubr.f32.gmra.mrb[0].mxu0 %v48
    %v119 = vpop.f32.mrb[0].mxu0
    %v120 = vadd.f32 0.0, %v119
    %v121 = vpop.f32.mrb[0].mxu0
    %122 = vmatprep.mubr.f32.mxu0 0.0
    %123 = vmatmul.mubr.f32.gmra.mrb[0].mxu0 %v51
    %v124 = vpop.f32.mrb[0].mxu0
    %v125 = vadd.f32 0.0, %v124
    %v126 = vpop.f32.mrb[0].mxu0
    %127 = vdwg.mxu0
    %129 = vrot.lane.b32.xlu0 %v120, 96
    %v130 = vpop.permute.xlu0 %129
    %v131 = vsel %vm46, %v120, 0
    %v133 = vsel %vm46, %v130, 0
    %135 = vmatprep.subr.mxu0 0.0
    %136 = vmatpush1.xpose.msra.mxu0 %v133
    %137 = vmatprep.subr.mxu0 0.0
    %138 = vmatpush1.xpose.msra.mxu0 0.0
    %139 = vmatprep.subr.mxu0 0.0
    %140 = vmatpush1.xpose.msra.mxu0 0.0
    %141 = vmatprep.subr.mxu0 0.0
    %142 = vmatpush1.xpose.msra.mxu0 0.0
    %143 = vmatprep.subr.mxu0 0.0
    %144 = vmatpush1.xpose.msra.mxu0 0.0
    %145 = vmatprep.subr.mxu0 0.0
    %146 = vmatpush1.xpose.msra.mxu0 0.0
    %147 = vmatprep.subr.mxu0 0.0
    %148 = vmatpush1.xpose.msra.mxu0 0.0
    %149 = vmatprep.subr.mxu0 0.0
    %150 = vmatpush1.xpose.msra.mxu0 0.0
    %151 = vmatprep.subr.mxu0 0.0
    %152 = vmatpush1.xpose.msra.mxu0 0.0
    %153 = vmatprep.subr.mxu0 0.0
    %154 = vmatpush1.xpose.msra.mxu0 0.0
    %155 = vmatprep.subr.mxu0 0.0
    %156 = vmatpush1.xpose.msra.mxu0 0.0
    %157 = vmatprep.subr.mxu0 0.0
    %158 = vmatpush1.xpose.msra.mxu0 0.0
    %159 = vmatprep.subr.mxu0 0.0
    %160 = vmatpush1.xpose.msra.mxu0 0.0
    %161 = vmatprep.subr.mxu0 0.0
    %162 = vmatpush1.xpose.msra.mxu0 0.0
    %163 = vmatprep.subr.mxu0 0.0
    %164 = vmatpush1.xpose.msra.mxu0 0.0
    %165 = vmatprep.subr.mxu0 0.0
    %166 = vmatpush1.xpose.msra.mxu0 0.0
    %167 = vmatprep.subr.mxu0 0.0
    %168 = vmatpush1.xpose.msra.mxu0 0.0
    %169 = vmatprep.subr.mxu0 0.0
    %170 = vmatpush1.xpose.msra.mxu0 0.0
    %171 = vmatprep.subr.mxu0 0.0
    %172 = vmatpush1.xpose.msra.mxu0 0.0
    %173 = vmatprep.subr.mxu0 0.0
    %174 = vmatpush1.xpose.msra.mxu0 0.0
    %175 = vmatprep.subr.mxu0 0.0
    %176 = vmatpush1.xpose.msra.mxu0 0.0
    %177 = vmatprep.subr.mxu0 0.0
    %178 = vmatpush1.xpose.msra.mxu0 0.0
    %179 = vmatprep.subr.mxu0 0.0
    %180 = vmatpush1.xpose.msra.mxu0 0.0
    %181 = vmatprep.subr.mxu0 0.0
    %182 = vmatpush1.xpose.msra.mxu0 0.0
    %183 = vmatprep.subr.mxu0 0.0
    %184 = vmatpush1.xpose.msra.mxu0 0.0
    %185 = vmatprep.subr.mxu0 0.0
    %186 = vmatpush1.xpose.msra.mxu0 0.0
    %187 = vmatprep.subr.mxu0 0.0
    %188 = vmatpush1.xpose.msra.mxu0 0.0
    %189 = vmatprep.subr.mxu0 0.0
    %190 = vmatpush1.xpose.msra.mxu0 0.0
    %191 = vmatprep.subr.mxu0 0.0
    %192 = vmatpush1.xpose.msra.mxu0 0.0
    %193 = vmatprep.subr.mxu0 0.0
    %194 = vmatpush1.xpose.msra.mxu0 0.0
    %195 = vmatprep.subr.mxu0 0.0
    %196 = vmatpush1.xpose.msra.mxu0 0.0
    %197 = vmatprep.subr.mxu0 0.0
    %198 = vmatpush1.xpose.msra.mxu0 0.0
    %199 = vmatprep.mubr.f32.mxu0 0.0
    %200 = vmatmul.mubr.f32.gmra.mrb[0].mxu0 %v131
    %v201 = vpop.f32.mrb[0].mxu0
    %v202 = vadd.f32 0.0, %v201
    %v203 = vpop.f32.mrb[0].mxu0
    %204 = vdwg.mxu0
    %206 = vrot.lane.b32.xlu0 %v125, 96
    %v207 = vpop.permute.xlu0 %206
    %v208 = vsel %vm46, %v125, 0
    %v210 = vsel %vm46, %v207, 0
    %212 = vmatprep.subr.mxu0 0.0
    %213 = vmatpush1.xpose.msra.mxu0 %v210
    %214 = vmatprep.subr.mxu0 0.0
    %215 = vmatpush1.xpose.msra.mxu0 0.0
    %216 = vmatprep.subr.mxu0 0.0
    %217 = vmatpush1.xpose.msra.mxu0 0.0
    %218 = vmatprep.subr.mxu0 0.0
    %219 = vmatpush1.xpose.msra.mxu0 0.0
    %220 = vmatprep.subr.mxu0 0.0
    %221 = vmatpush1.xpose.msra.mxu0 0.0
    %222 = vmatprep.subr.mxu0 0.0
    %223 = vmatpush1.xpose.msra.mxu0 0.0
    %224 = vmatprep.subr.mxu0 0.0
    %225 = vmatpush1.xpose.msra.mxu0 0.0
    %226 = vmatprep.subr.mxu0 0.0
    %227 = vmatpush1.xpose.msra.mxu0 0.0
    %228 = vmatprep.subr.mxu0 0.0
    %229 = vmatpush1.xpose.msra.mxu0 0.0
    %230 = vmatprep.subr.mxu0 0.0
    %231 = vmatpush1.xpose.msra.mxu0 0.0
    %232 = vmatprep.subr.mxu0 0.0
    %233 = vmatpush1.xpose.msra.mxu0 0.0
    %234 = vmatprep.subr.mxu0 0.0
    %235 = vmatpush1.xpose.msra.mxu0 0.0
    %236 = vmatprep.subr.mxu0 0.0
    %237 = vmatpush1.xpose.msra.mxu0 0.0
    %238 = vmatprep.subr.mxu0 0.0
    %239 = vmatpush1.xpose.msra.mxu0 0.0
    %240 = vmatprep.subr.mxu0 0.0
    %241 = vmatpush1.xpose.msra.mxu0 0.0
    %242 = vmatprep.subr.mxu0 0.0
    %243 = vmatpush1.xpose.msra.mxu0 0.0
    %244 = vmatprep.subr.mxu0 0.0
    %245 = vmatpush1.xpose.msra.mxu0 0.0
    %246 = vmatprep.subr.mxu0 0.0
    %247 = vmatpush1.xpose.msra.mxu0 0.0
    %248 = vmatprep.subr.mxu0 0.0
    %249 = vmatpush1.xpose.msra.mxu0 0.0
    %250 = vmatprep.subr.mxu0 0.0
    %251 = vmatpush1.xpose.msra.mxu0 0.0
    %252 = vmatprep.subr.mxu0 0.0
    %253 = vmatpush1.xpose.msra.mxu0 0.0
    %254 = vmatprep.subr.mxu0 0.0
    %255 = vmatpush1.xpose.msra.mxu0 0.0
    %256 = vmatprep.subr.mxu0 0.0
    %257 = vmatpush1.xpose.msra.mxu0 0.0
    %258 = vmatprep.subr.mxu0 0.0
    %259 = vmatpush1.xpose.msra.mxu0 0.0
    %260 = vmatprep.subr.mxu0 0.0
    %261 = vmatpush1.xpose.msra.mxu0 0.0
    %262 = vmatprep.subr.mxu0 0.0
    %263 = vmatpush1.xpose.msra.mxu0 0.0
    %264 = vmatprep.subr.mxu0 0.0
    %265 = vmatpush1.xpose.msra.mxu0 0.0
    %266 = vmatprep.subr.mxu0 0.0
    %267 = vmatpush1.xpose.msra.mxu0 0.0
    %268 = vmatprep.subr.mxu0 0.0
    %269 = vmatpush1.xpose.msra.mxu0 0.0
    %270 = vmatprep.subr.mxu0 0.0
    %271 = vmatpush1.xpose.msra.mxu0 0.0
    %272 = vmatprep.subr.mxu0 0.0
    %273 = vmatpush1.xpose.msra.mxu0 0.0
    %274 = vmatprep.subr.mxu0 0.0
    %275 = vmatpush1.xpose.msra.mxu0 0.0
    %276 = vmatprep.mubr.f32.mxu0 0.0
    %277 = vmatmul.mubr.f32.gmra.mrb[0].mxu0 %v208
    %v278 = vpop.f32.mrb[0].mxu0
    %v279 = vadd.f32 0.0, %v278
    %v280 = vpop.f32.mrb[0].mxu0
    %281 = vdwg.mxu0
    %vm282 = vcmask 64512
    %v283 = vsel %vm282, %v202, -inf
    %284 = vmax.xlane.f32.xlu0 %v283
    %v285 = vpop.xlane.xlu0 %284
    %v286 = vsel %vm282, %v279, -inf
    %287 = vmax.xlane.f32.xlu0 %v286
    %v288 = vpop.xlane.xlu0 %287
    %v289 = vsub.f32 %v202, %v285
    %v290 = vsub.f32 %v279, %v288
    %v291 = vmul.f32 %v289, 1.442695
    %v292 = vpow.pop %v291
    %v293 = vmul.f32 %v290, 1.442695
    %v294 = vpow.pop %v293
    %v295 = vsel %vm282, %v292, 0.0
    %296 = vadd.xlane.f32.xlu0 %v295
    %v297 = vpop.xlane.xlu0 %296
    %v298 = vsel %vm282, %v294, 0.0
    %299 = vadd.xlane.f32.xlu0 %v298
    %v300 = vpop.xlane.xlu0 %299
    %301 = vrot.lane.b32.xlu0 %v120, 64
    %v302 = vpop.permute.xlu0 %301
    %v305 = vsel %vm282, %v292, 0
    %307 = vmatprep.subr.mxu0 0.0
    %308 = vmatpush1.msra.mxu0 %v302
    %309 = vmatprep.subr.mxu0 0.0
    %310 = vmatpush1.msra.mxu0 0.0
    %311 = vmatprep.subr.mxu0 0.0
    %312 = vmatpush1.msra.mxu0 0.0
    %313 = vmatprep.subr.mxu0 0.0
    %314 = vmatpush1.msra.mxu0 0.0
    %315 = vmatprep.subr.mxu0 0.0
    %316 = vmatpush1.msra.mxu0 0.0
    %317 = vmatprep.subr.mxu0 0.0
    %318 = vmatpush1.msra.mxu0 0.0
    %319 = vmatprep.subr.mxu0 0.0
    %320 = vmatpush1.msra.mxu0 0.0
    %321 = vmatprep.subr.mxu0 0.0
    %322 = vmatpush1.msra.mxu0 0.0
    %323 = vmatprep.subr.mxu0 0.0
    %324 = vmatpush1.msra.mxu0 0.0
    %325 = vmatprep.subr.mxu0 0.0
    %326 = vmatpush1.msra.mxu0 0.0
    %327 = vmatprep.subr.mxu0 0.0
    %328 = vmatpush1.msra.mxu0 0.0
    %329 = vmatprep.subr.mxu0 0.0
    %330 = vmatpush1.msra.mxu0 0.0
    %331 = vmatprep.subr.mxu0 0.0
    %332 = vmatpush1.msra.mxu0 0.0
    %333 = vmatprep.subr.mxu0 0.0
    %334 = vmatpush1.msra.mxu0 0.0
    %335 = vmatprep.subr.mxu0 0.0
    %336 = vmatpush1.msra.mxu0 0.0
    %337 = vmatprep.subr.mxu0 0.0
    %338 = vmatpush1.msra.mxu0 0.0
    %339 = vmatprep.subr.mxu0 0.0
    %340 = vmatpush1.msra.mxu0 0.0
    %341 = vmatprep.subr.mxu0 0.0
    %342 = vmatpush1.msra.mxu0 0.0
    %343 = vmatprep.subr.mxu0 0.0
    %344 = vmatpush1.msra.mxu0 0.0
    %345 = vmatprep.subr.mxu0 0.0
    %346 = vmatpush1.msra.mxu0 0.0
    %347 = vmatprep.subr.mxu0 0.0
    %348 = vmatpush1.msra.mxu0 0.0
    %349 = vmatprep.subr.mxu0 0.0
    %350 = vmatpush1.msra.mxu0 0.0
    %351 = vmatprep.subr.mxu0 0.0
    %352 = vmatpush1.msra.mxu0 0.0
    %353 = vmatprep.subr.mxu0 0.0
    %354 = vmatpush1.msra.mxu0 0.0
    %355 = vmatprep.subr.mxu0 0.0
    %356 = vmatpush1.msra.mxu0 0.0
    %357 = vmatprep.subr.mxu0 0.0
    %358 = vmatpush1.msra.mxu0 0.0
    %359 = vmatprep.subr.mxu0 0.0
    %360 = vmatpush1.msra.mxu0 0.0
    %361 = vmatprep.subr.mxu0 0.0
    %362 = vmatpush1.msra.mxu0 0.0
    %363 = vmatprep.subr.mxu0 0.0
    %364 = vmatpush1.msra.mxu0 0.0
    %365 = vmatprep.subr.mxu0 0.0
    %366 = vmatpush1.msra.mxu0 0.0
    %367 = vmatprep.subr.mxu0 0.0
    %368 = vmatpush1.msra.mxu0 0.0
    %369 = vmatprep.subr.mxu0 0.0
    %370 = vmatpush1.msra.mxu0 0.0
    %371 = vmatprep.mubr.f32.mxu0 0.0
    %372 = vmatmul.mubr.f32.gmra.mrb[0].mxu0 %v305
    %v373 = vpop.f32.mrb[0].mxu0
    %v374 = vadd.f32 0.0, %v373
    %v375 = vpop.f32.mrb[0].mxu0
    %376 = vdwg.mxu0
    %377 = vrot.lane.b32.xlu0 %v125, 64
    %v378 = vpop.permute.xlu0 %377
    %v381 = vsel %vm282, %v294, 0
    %383 = vmatprep.subr.mxu0 0.0
    %384 = vmatpush1.msra.mxu0 %v378
    %385 = vmatprep.subr.mxu0 0.0
    %386 = vmatpush1.msra.mxu0 0.0
    %387 = vmatprep.subr.mxu0 0.0
    %388 = vmatpush1.msra.mxu0 0.0
    %389 = vmatprep.subr.mxu0 0.0
    %390 = vmatpush1.msra.mxu0 0.0
    %391 = vmatprep.subr.mxu0 0.0
    %392 = vmatpush1.msra.mxu0 0.0
    %393 = vmatprep.subr.mxu0 0.0
    %394 = vmatpush1.msra.mxu0 0.0
    %395 = vmatprep.subr.mxu0 0.0
    %396 = vmatpush1.msra.mxu0 0.0
    %397 = vmatprep.subr.mxu0 0.0
    %398 = vmatpush1.msra.mxu0 0.0
    %399 = vmatprep.subr.mxu0 0.0
    %400 = vmatpush1.msra.mxu0 0.0
    %401 = vmatprep.subr.mxu0 0.0
    %402 = vmatpush1.msra.mxu0 0.0
    %403 = vmatprep.subr.mxu0 0.0
    %404 = vmatpush1.msra.mxu0 0.0
    %405 = vmatprep.subr.mxu0 0.0
    %406 = vmatpush1.msra.mxu0 0.0
    %407 = vmatprep.subr.mxu0 0.0
    %408 = vmatpush1.msra.mxu0 0.0
    %409 = vmatprep.subr.mxu0 0.0
    %410 = vmatpush1.msra.mxu0 0.0
    %411 = vmatprep.subr.mxu0 0.0
    %412 = vmatpush1.msra.mxu0 0.0
    %413 = vmatprep.subr.mxu0 0.0
    %414 = vmatpush1.msra.mxu0 0.0
    %415 = vmatprep.subr.mxu0 0.0
    %416 = vmatpush1.msra.mxu0 0.0
    %417 = vmatprep.subr.mxu0 0.0
    %418 = vmatpush1.msra.mxu0 0.0
    %419 = vmatprep.subr.mxu0 0.0
    %420 = vmatpush1.msra.mxu0 0.0
    %421 = vmatprep.subr.mxu0 0.0
    %422 = vmatpush1.msra.mxu0 0.0
    %423 = vmatprep.subr.mxu0 0.0
    %424 = vmatpush1.msra.mxu0 0.0
    %425 = vmatprep.subr.mxu0 0.0
    %426 = vmatpush1.msra.mxu0 0.0
    %427 = vmatprep.subr.mxu0 0.0
    %428 = vmatpush1.msra.mxu0 0.0
    %429 = vmatprep.subr.mxu0 0.0
    %430 = vmatpush1.msra.mxu0 0.0
    %431 = vmatprep.subr.mxu0 0.0
    %432 = vmatpush1.msra.mxu0 0.0
    %433 = vmatprep.subr.mxu0 0.0
    %434 = vmatpush1.msra.mxu0 0.0
    %435 = vmatprep.subr.mxu0 0.0
    %436 = vmatpush1.msra.mxu0 0.0
    %437 = vmatprep.subr.mxu0 0.0
    %438 = vmatpush1.msra.mxu0 0.0
    %439 = vmatprep.subr.mxu0 0.0
    %440 = vmatpush1.msra.mxu0 0.0
    %441 = vmatprep.subr.mxu0 0.0
    %442 = vmatpush1.msra.mxu0 0.0
    %443 = vmatprep.subr.mxu0 0.0
    %444 = vmatpush1.msra.mxu0 0.0
    %445 = vmatprep.subr.mxu0 0.0
    %446 = vmatpush1.msra.mxu0 0.0
    %447 = vmatprep.mubr.f32.mxu0 0.0
    %448 = vmatmul.mubr.f32.gmra.mrb[0].mxu0 %v381
    %v449 = vpop.f32.mrb[0].mxu0
    %v450 = vadd.f32 0.0, %v449
    %v451 = vpop.f32.mrb[0].mxu0
    %452 = vdwg.mxu0
    %v453 = vrcp.pop %v297
    %v454 = vrcp.pop %v300
    %v455 = vmul.f32 %v374, %v453
    %v456 = vmul.f32 %v450, %v454
    %457 = vst.msk [vmem:[#allocation7] sm:$0xff] %vm46, %v455
    %458 = vst.msk [vmem:[#allocation7 + $0x8] sm:$0xff] %vm46, %v456
    // Predicated region
    $region18: #{self_attn_mini_prepared.1} parent=1 // pred_check
      _
    $region19: #{self_attn_mini_prepared.1} parent=1 // pred_check_branch
      %460 = sbr.rel (0) target = $region21
    $region20: #{self_attn_mini_prepared.1} parent=1 // pred_region
      %s462 = ssub.s32 256, 256
      %463 = vsyncadd [#allocation4], %s462
      %s464 = sshll.u32 [#allocation7], 4
      %s465 = int_to_ptr.vmem [resolvable:$true] %s464
      %470 = dma.vmem_to_hbm [thread:$0]  %s465, 256, %s2, [#allocation4], 128, 128, 8
    $region21: #{self_attn_mini_prepared.1} parent=1 // pred_fallthru
      _
    // Predicated region
    $region22: #{self_attn_mini_prepared.1} parent=1 // pred_check
      _
    $region23: #{self_attn_mini_prepared.1} parent=1 // pred_check_branch
      %472 = sbr.rel (0) target = $region25
    $region24: #{self_attn_mini_prepared.1} parent=1 // pred_region
      %473 = dma.done [#allocation4], 256
    $region25: #{self_attn_mini_prepared.1} parent=1 // pred_fallthru
      _
    %474 = vsyncpa [#allocation3], 1
    %475 = vsyncpa [#allocation6], 1
    %476 = vsyncpa [#allocation4], 1

</llo_original>
